<compile_context>
chip_gen: v6e
topology: v6e:2x2x1
jax: 0.10.0
libtpu: 0.0.40
codegen_flags: <defaults>
</compile_context>

<pallas_src>
import functools

import jax
import jax.numpy as jnp
from jax import lax
from jax.experimental import pallas as pl
from jax.experimental.pallas import tpu as pltpu


def _attention_kernel(x_ref, wq_ref, wk_ref, wv_ref, wp_ref, bproj_ref,
                      padb_ref, o_ref, *, block_b, seq_len, num_heads, scale):
    """One grid step = `block_b` batch elements, all heads.

    x_ref    : (block_b*N, C) bf16   flattened activations
    wq/wk/wv : (H, C, hd)     bf16   per-head projection weights (resident)
    wp_ref   : (H, hd, C)     bf16   per-head rows of Wproj^T     (resident)
    bproj_ref: (1, C)         f32    projection bias
    padb_ref : (block_b, 1, N) f32   additive key-mask bias
    o_ref    : (block_b*N, C) f32    output block
    """
    x = x_ref[...]                                              # (Bt*N, C) bf16
    C = o_ref.shape[1]

    # Mask-bias rows are head-invariant: load once, reuse for every head.
    pad_rows = [padb_ref[b] for b in range(block_b)]            # each (1, N) f32

    def head_body(h, acc):
        # Per-head weights: dynamic leading-axis index -> no lane slicing.
        wq = wq_ref[h]                                          # (C, hd) bf16
        wk = wk_ref[h]
        wv = wv_ref[h]
        wp = wp_ref[h]                                          # (hd, C) bf16

        # Q/K/V projections over all block_b*N rows at once (bf16 in, f32 acc).
        q = jnp.dot(x, wq, preferred_element_type=jnp.float32)  # (Bt*N, hd)
        k = jnp.dot(x, wk, preferred_element_type=jnp.float32)
        v = jnp.dot(x, wv, preferred_element_type=jnp.float32)

        qb = (q * scale).astype(jnp.bfloat16)   # fold scale into q (f32) first
        kb = k.astype(jnp.bfloat16)
        vb = v.astype(jnp.bfloat16)

        new_acc = []
        for b in range(block_b):                                # static, small
            rows = slice(b * seq_len, (b + 1) * seq_len)
            qh = qb[rows]                                       # (N, hd)
            kh = kb[rows]
            vh = vb[rows]

            # (N, N) scores: contract on head_dim of both operands (no k.T).
            s = lax.dot_general(qh, kh, (((1,), (1,)), ((), ())),
                                preferred_element_type=jnp.float32)
            s = s + pad_rows[b]                                 # (N,N)+(1,N) f32

            # Numerically-stable softmax in f32; reciprocal on the EUP.
            m = jnp.max(s, axis=-1, keepdims=True)
            e = jnp.exp(s - m)
            p = e * pl.reciprocal(jnp.sum(e, axis=-1, keepdims=True),
                                  approx=True)

            ctx = jnp.dot(p.astype(jnp.bfloat16), vh,
                          preferred_element_type=jnp.float32)   # (N, hd)

            # Accumulate this head's output-projection contribution into the
            # loop-carried f32 accumulator (no output-ref round-trip per head).
            new_acc.append(acc[b] + jnp.dot(ctx.astype(jnp.bfloat16), wp,
                                            preferred_element_type=jnp.float32))
        return tuple(new_acc)

    init = tuple(jnp.zeros((seq_len, C), jnp.float32) for _ in range(block_b))
    acc = lax.fori_loop(0, num_heads, head_body, init)

    # Single lane-dense (N, C) store per batch element: bias + sum over heads.
    bias = bproj_ref[...]                                       # (1, C) f32
    for b in range(block_b):
        rows = slice(b * seq_len, (b + 1) * seq_len)
        o_ref[rows, :] = acc[b] + bias


def attention_forward(x, wqkv, wproj, bproj, pad_mask, *, num_heads, block_b=1):
    """x: (B, N, C) f32.  wqkv: (3C, C) torch layout.  wproj: (C, C) torch layout.
    bproj: (C,).  pad_mask: (B, N-1) or None (0=keep, 1=ignore)."""
    B, N, C = x.shape
    assert C % num_heads == 0
    assert B % block_b == 0, "block_b must divide the batch size"
    head_dim = C // num_heads
    scale = head_dim ** (-0.5)

    # torch nn.Linear computes x @ W.T + b.  Split the qkv / proj weights into
    # per-head blocks so the kernel never slices the lane axis:
    #   wq/wk/wv[h] : (C, hd)  with  x @ wq[h] == q_h
    #   wp[h]       : (hd, C)  rows h*hd:(h+1)*hd of Wproj^T
    wq_h = jnp.transpose(wqkv[0 * C:1 * C].reshape(num_heads, head_dim, C),
                         (0, 2, 1)).astype(jnp.bfloat16)
    wk_h = jnp.transpose(wqkv[1 * C:2 * C].reshape(num_heads, head_dim, C),
                         (0, 2, 1)).astype(jnp.bfloat16)
    wv_h = jnp.transpose(wqkv[2 * C:3 * C].reshape(num_heads, head_dim, C),
                         (0, 2, 1)).astype(jnp.bfloat16)
    wp_h = jnp.transpose(wproj).reshape(num_heads, head_dim, C).astype(jnp.bfloat16)
    bproj2d = bproj.reshape(1, C).astype(jnp.float32)

    # Additive key-mask bias exactly as the torch code applies it:
    # column 0 stays 0, columns 1: get pad_mask * -1e8.
    if pad_mask is None:
        pad_bias = jnp.zeros((B, 1, N), jnp.float32)
    else:
        pad_bias = jnp.concatenate(
            [jnp.zeros((B, 1), jnp.float32),
             pad_mask.astype(jnp.float32) * (-100000000.0)], axis=1
        ).reshape(B, 1, N)

    # bf16 MXU inputs; accumulation / masking / softmax stay f32 in the kernel.
    x_flat = x.reshape(B * N, C).astype(jnp.bfloat16)
    rows_per_step = block_b * N

    kernel = functools.partial(_attention_kernel, block_b=block_b, seq_len=N,
                               num_heads=num_heads, scale=scale)

    out_flat = pl.pallas_call(
        kernel,
        out_shape=jax.ShapeDtypeStruct((B * N, C), jnp.float32),
        grid_spec=pltpu.PrefetchScalarGridSpec(
            num_scalar_prefetch=0,
            grid=(B // block_b,),
            in_specs=[
                pl.BlockSpec((rows_per_step, C), lambda i: (i, 0)),           # x
                pl.BlockSpec((num_heads, C, head_dim), lambda i: (0, 0, 0)),  # Wq
                pl.BlockSpec((num_heads, C, head_dim), lambda i: (0, 0, 0)),  # Wk
                pl.BlockSpec((num_heads, C, head_dim), lambda i: (0, 0, 0)),  # Wv
                pl.BlockSpec((num_heads, head_dim, C), lambda i: (0, 0, 0)),  # Wp
                pl.BlockSpec((1, C), lambda i: (0, 0)),                       # bias
                pl.BlockSpec((block_b, 1, N), lambda i: (i, 0, 0)),           # mask
            ],
            out_specs=pl.BlockSpec((rows_per_step, C), lambda i: (i, 0)),
        ),
        compiler_params=pltpu.CompilerParams(
            dimension_semantics=("parallel",),
            vmem_limit_bytes=64 * 1024 * 1024),
    )(x_flat, wq_h, wk_h, wv_h, wp_h, bproj2d, pad_bias)

    return out_flat.reshape(B, N, C)


def attention_reference(x, wqkv, wproj, bproj, pad_mask, *, num_heads):
    """Pure-JAX reference mirroring the PyTorch forward exactly (f32)."""
    B, N, C = x.shape
    hd = C // num_heads
    scale = hd ** (-0.5)
    qkv = x @ wqkv.T                                             # (B, N, 3C)
    qkv = qkv.reshape(B, N, 3, num_heads, hd).transpose(2, 0, 3, 1, 4)
    q, k, v = qkv[0], qkv[1], qkv[2]                             # (B, H, N, hd)
    attn = jnp.einsum('bhnd,bhmd->bhnm', q, k) * scale
    if pad_mask is not None:
        attn = attn.at[..., :, 1:].add(pad_mask.reshape(B, 1, 1, -1) * (-100000000.0))
    attn = jax.nn.softmax(attn, axis=-1)
    out = jnp.einsum('bhnm,bhmd->bhnd', attn, v)
    out = out.transpose(0, 2, 1, 3).reshape(B, N, C)
    return out @ wproj.T + bproj


if __name__ == "__main__":
    B, N, C = 4, 8, 32
    num_heads = 4

    key = jax.random.PRNGKey(0)
    kx, kw1, kw2, kb2, km = jax.random.split(key, 5)

    x = jax.random.normal(kx, (B, N, C), jnp.float32)
    # Deterministic synthetic parameters (torch nn.Linear layouts: (out, in))
    wqkv = jax.random.normal(kw1, (3 * C, C), jnp.float32) * 0.05  # qkv_bias=False
    wproj = jax.random.normal(kw2, (C, C), jnp.float32) * 0.05
    bproj = jax.random.normal(kb2, (C,), jnp.float32) * 0.05
    pad_mask = (jax.random.uniform(km, (B, N - 1)) > 0.7).astype(jnp.float32)

    out = attention_forward(x, wqkv, wproj, bproj, pad_mask,
                            num_heads=num_heads, block_b=2)
    out = jax.block_until_ready(out)

    # Reference with the same bf16 input quantization the kernel feeds the MXU
    # (all arithmetic in the reference itself stays f32).
    xq = x.astype(jnp.bfloat16).astype(jnp.float32)
    wqkvq = wqkv.astype(jnp.bfloat16).astype(jnp.float32)
    wprojq = wproj.astype(jnp.bfloat16).astype(jnp.float32)
    ref = attention_reference(xq, wqkvq, wprojq, bproj, pad_mask,
                              num_heads=num_heads)

    assert out.shape == (B, N, C)
    err = jnp.max(jnp.abs(out - ref))
    assert jnp.allclose(out, ref, atol=1e-2, rtol=1e-2), f"max abs err {err}"

    print("KERNEL_OK")
</pallas_src>

<mosaic_0001>
module attributes {stable_mosaic.version = 11 : i64} {
  func.func @_attention_kernel(%arg0: i32, %arg1: memref<16x32xbf16, #tpu.memory_space<vmem>>, %arg2: memref<4x32x8xbf16, #tpu.memory_space<vmem>>, %arg3: memref<4x32x8xbf16, #tpu.memory_space<vmem>>, %arg4: memref<4x32x8xbf16, #tpu.memory_space<vmem>>, %arg5: memref<4x8x32xbf16, #tpu.memory_space<vmem>>, %arg6: memref<1x32xf32, #tpu.memory_space<vmem>>, %arg7: memref<2x1x8xf32, #tpu.memory_space<vmem>>, %arg8: memref<16x32xf32, #tpu.memory_space<vmem>>) attributes {dimension_semantics = [#tpu.dimension_semantics<parallel>], iteration_bounds = array<i64: 2>, scalar_prefetch = 0 : i64, scratch_operands = 0 : i64, tpu.core_type = #tpu.core_type<tc>, window_params = [{transform_indices = @transform_0, window_bounds = array<i64: 16, 32>}, {pipeline_mode = #tpu.pipeline_mode<synchronous>, transform_indices = @transform_1, window_bounds = array<i64: 4, 32, 8>}, {pipeline_mode = #tpu.pipeline_mode<synchronous>, transform_indices = @transform_2, window_bounds = array<i64: 4, 32, 8>}, {pipeline_mode = #tpu.pipeline_mode<synchronous>, transform_indices = @transform_3, window_bounds = array<i64: 4, 32, 8>}, {pipeline_mode = #tpu.pipeline_mode<synchronous>, transform_indices = @transform_4, window_bounds = array<i64: 4, 8, 32>}, {pipeline_mode = #tpu.pipeline_mode<synchronous>, transform_indices = @transform_5, window_bounds = array<i64: 1, 32>}, {transform_indices = @transform_6, window_bounds = array<i64: 2, 1, 8>}, {transform_indices = @transform_7, window_bounds = array<i64: 16, 32>}]} {
    %c0 = arith.constant 0 : index
    %c0_0 = arith.constant 0 : index
    %0 = vector.load %arg1[%c0, %c0_0] : memref<16x32xbf16, #tpu.memory_space<vmem>>, vector<16x32xbf16>
    %c0_1 = arith.constant 0 : index
    %c0_2 = arith.constant 0 : index
    %c0_3 = arith.constant 0 : index
    %1 = vector.load %arg7[%c0_1, %c0_2, %c0_3] : memref<2x1x8xf32, #tpu.memory_space<vmem>>, vector<1x1x8xf32>
    %2 = vector.shape_cast %1 : vector<1x1x8xf32> to vector<1x8xf32>
    %c1 = arith.constant 1 : index
    %c0_4 = arith.constant 0 : index
    %c0_5 = arith.constant 0 : index
    %3 = vector.load %arg7[%c1, %c0_4, %c0_5] : memref<2x1x8xf32, #tpu.memory_space<vmem>>, vector<1x1x8xf32>
    %4 = vector.shape_cast %3 : vector<1x1x8xf32> to vector<1x8xf32>
    %cst = arith.constant 0.000000e+00 : f32
    %5 = vector.broadcast %cst : f32 to vector<8x32xf32>
    %cst_6 = arith.constant 0.000000e+00 : f32
    %6 = vector.broadcast %cst_6 : f32 to vector<8x32xf32>
    %c0_i32 = arith.constant 0 : i32
    %c4_i32 = arith.constant 4 : i32
    %7 = arith.addi %c0_i32, %c4_i32 : i32
    %c1_i32 = arith.constant 1 : i32
    %8:2 = scf.for %arg9 = %c0_i32 to %7 step %c1_i32 iter_args(%arg10 = %5, %arg11 = %6) -> (vector<8x32xf32>, vector<8x32xf32>)  : i32 {
      %16 = arith.index_cast %arg9 : i32 to index
      %c0_13 = arith.constant 0 : index
      %c0_14 = arith.constant 0 : index
      %17 = vector.load %arg2[%16, %c0_13, %c0_14] : memref<4x32x8xbf16, #tpu.memory_space<vmem>>, vector<1x32x8xbf16>
      %18 = vector.shape_cast %17 : vector<1x32x8xbf16> to vector<32x8xbf16>
      %19 = arith.index_cast %arg9 : i32 to index
      %c0_15 = arith.constant 0 : index
      %c0_16 = arith.constant 0 : index
      %20 = vector.load %arg3[%19, %c0_15, %c0_16] : memref<4x32x8xbf16, #tpu.memory_space<vmem>>, vector<1x32x8xbf16>
      %21 = vector.shape_cast %20 : vector<1x32x8xbf16> to vector<32x8xbf16>
      %22 = arith.index_cast %arg9 : i32 to index
      %c0_17 = arith.constant 0 : index
      %c0_18 = arith.constant 0 : index
      %23 = vector.load %arg4[%22, %c0_17, %c0_18] : memref<4x32x8xbf16, #tpu.memory_space<vmem>>, vector<1x32x8xbf16>
      %24 = vector.shape_cast %23 : vector<1x32x8xbf16> to vector<32x8xbf16>
      %25 = arith.index_cast %arg9 : i32 to index
      %c0_19 = arith.constant 0 : index
      %c0_20 = arith.constant 0 : index
      %26 = vector.load %arg5[%25, %c0_19, %c0_20] : memref<4x8x32xbf16, #tpu.memory_space<vmem>>, vector<1x8x32xbf16>
      %27 = vector.shape_cast %26 : vector<1x8x32xbf16> to vector<8x32xbf16>
      %cst_21 = arith.constant dense<0.000000e+00> : vector<16x8xf32>
      %28 = tpu.matmul %0, %18, %cst_21 {dimension_numbers = #tpu.dot_dimension_numbers<[1], [0], [0], [1], [0, 0, 1, 1], [], []>} : vector<16x32xbf16>, vector<32x8xbf16>, vector<16x8xf32> -> vector<16x8xf32>
      %cst_22 = arith.constant dense<0.000000e+00> : vector<16x8xf32>
      %29 = tpu.matmul %0, %21, %cst_22 {dimension_numbers = #tpu.dot_dimension_numbers<[1], [0], [0], [1], [0, 0, 1, 1], [], []>} : vector<16x32xbf16>, vector<32x8xbf16>, vector<16x8xf32> -> vector<16x8xf32>
      %cst_23 = arith.constant dense<0.000000e+00> : vector<16x8xf32>
      %30 = tpu.matmul %0, %24, %cst_23 {dimension_numbers = #tpu.dot_dimension_numbers<[1], [0], [0], [1], [0, 0, 1, 1], [], []>} : vector<16x32xbf16>, vector<32x8xbf16>, vector<16x8xf32> -> vector<16x8xf32>
      %cst_24 = arith.constant 0.353553385 : f32
      %31 = vector.broadcast %cst_24 : f32 to vector<16x8xf32>
      %32 = arith.mulf %28, %31 : vector<16x8xf32>
      %33 = arith.truncf %32 : vector<16x8xf32> to vector<16x8xbf16>
      %34 = arith.truncf %29 : vector<16x8xf32> to vector<16x8xbf16>
      %35 = arith.truncf %30 : vector<16x8xf32> to vector<16x8xbf16>
      %36 = vector.extract_strided_slice %33 {offsets = [0, 0], sizes = [8, 8], strides = [1, 1]} : vector<16x8xbf16> to vector<8x8xbf16>
      %37 = vector.extract_strided_slice %34 {offsets = [0, 0], sizes = [8, 8], strides = [1, 1]} : vector<16x8xbf16> to vector<8x8xbf16>
      %38 = vector.extract_strided_slice %35 {offsets = [0, 0], sizes = [8, 8], strides = [1, 1]} : vector<16x8xbf16> to vector<8x8xbf16>
      %cst_25 = arith.constant dense<0.000000e+00> : vector<8x8xf32>
      %39 = tpu.matmul %36, %37, %cst_25 {dimension_numbers = #tpu.dot_dimension_numbers<[1], [1], [0], [0], [0, 0, 1, 0], [], []>} : vector<8x8xbf16>, vector<8x8xbf16>, vector<8x8xf32> -> vector<8x8xf32>
      %40 = vector.broadcast %2 : vector<1x8xf32> to vector<8x8xf32>
      %41 = arith.addf %39, %40 : vector<8x8xf32>
      %cst_26 = arith.constant dense<0xFF800000> : vector<8xf32>
      %42 = vector.multi_reduction <maximumf>, %41, %cst_26 [1] : vector<8x8xf32> to vector<8xf32>
      %43 = vector.shape_cast %42 : vector<8xf32> to vector<8x1xf32>
      %44 = vector.broadcast %43 : vector<8x1xf32> to vector<8x8xf32>
      %45 = arith.subf %41, %44 : vector<8x8xf32>
      %46 = math.exp %45 : vector<8x8xf32>
      %cst_27 = arith.constant dense<0.000000e+00> : vector<8xf32>
      %47 = vector.multi_reduction <add>, %46, %cst_27 [1] : vector<8x8xf32> to vector<8xf32>
      %48 = vector.shape_cast %47 : vector<8xf32> to vector<8x1xf32>
      %49 = tpu.reciprocal %48 {approx = true} : vector<8x1xf32> -> vector<8x1xf32>
      %50 = vector.broadcast %49 : vector<8x1xf32> to vector<8x8xf32>
      %51 = arith.mulf %46, %50 : vector<8x8xf32>
      %52 = arith.truncf %51 : vector<8x8xf32> to vector<8x8xbf16>
      %cst_28 = arith.constant dense<0.000000e+00> : vector<8x8xf32>
      %53 = tpu.matmul %52, %38, %cst_28 {dimension_numbers = #tpu.dot_dimension_numbers<[1], [0], [0], [1], [0, 0, 1, 1], [], []>} : vector<8x8xbf16>, vector<8x8xbf16>, vector<8x8xf32> -> vector<8x8xf32>
      %54 = arith.truncf %53 : vector<8x8xf32> to vector<8x8xbf16>
      %cst_29 = arith.constant dense<0.000000e+00> : vector<8x32xf32>
      %55 = tpu.matmul %54, %27, %cst_29 {dimension_numbers = #tpu.dot_dimension_numbers<[1], [0], [0], [1], [0, 0, 1, 1], [], []>} : vector<8x8xbf16>, vector<8x32xbf16>, vector<8x32xf32> -> vector<8x32xf32>
      %56 = arith.addf %arg10, %55 : vector<8x32xf32>
      %57 = vector.extract_strided_slice %33 {offsets = [8, 0], sizes = [8, 8], strides = [1, 1]} : vector<16x8xbf16> to vector<8x8xbf16>
      %58 = vector.extract_strided_slice %34 {offsets = [8, 0], sizes = [8, 8], strides = [1, 1]} : vector<16x8xbf16> to vector<8x8xbf16>
      %59 = vector.extract_strided_slice %35 {offsets = [8, 0], sizes = [8, 8], strides = [1, 1]} : vector<16x8xbf16> to vector<8x8xbf16>
      %cst_30 = arith.constant dense<0.000000e+00> : vector<8x8xf32>
      %60 = tpu.matmul %57, %58, %cst_30 {dimension_numbers = #tpu.dot_dimension_numbers<[1], [1], [0], [0], [0, 0, 1, 0], [], []>} : vector<8x8xbf16>, vector<8x8xbf16>, vector<8x8xf32> -> vector<8x8xf32>
      %61 = vector.broadcast %4 : vector<1x8xf32> to vector<8x8xf32>
      %62 = arith.addf %60, %61 : vector<8x8xf32>
      %cst_31 = arith.constant dense<0xFF800000> : vector<8xf32>
      %63 = vector.multi_reduction <maximumf>, %62, %cst_31 [1] : vector<8x8xf32> to vector<8xf32>
      %64 = vector.shape_cast %63 : vector<8xf32> to vector<8x1xf32>
      %65 = vector.broadcast %64 : vector<8x1xf32> to vector<8x8xf32>
      %66 = arith.subf %62, %65 : vector<8x8xf32>
      %67 = math.exp %66 : vector<8x8xf32>
      %cst_32 = arith.constant dense<0.000000e+00> : vector<8xf32>
      %68 = vector.multi_reduction <add>, %67, %cst_32 [1] : vector<8x8xf32> to vector<8xf32>
      %69 = vector.shape_cast %68 : vector<8xf32> to vector<8x1xf32>
      %70 = tpu.reciprocal %69 {approx = true} : vector<8x1xf32> -> vector<8x1xf32>
      %71 = vector.broadcast %70 : vector<8x1xf32> to vector<8x8xf32>
      %72 = arith.mulf %67, %71 : vector<8x8xf32>
      %73 = arith.truncf %72 : vector<8x8xf32> to vector<8x8xbf16>
      %cst_33 = arith.constant dense<0.000000e+00> : vector<8x8xf32>
      %74 = tpu.matmul %73, %59, %cst_33 {dimension_numbers = #tpu.dot_dimension_numbers<[1], [0], [0], [1], [0, 0, 1, 1], [], []>} : vector<8x8xbf16>, vector<8x8xbf16>, vector<8x8xf32> -> vector<8x8xf32>
      %75 = arith.truncf %74 : vector<8x8xf32> to vector<8x8xbf16>
      %cst_34 = arith.constant dense<0.000000e+00> : vector<8x32xf32>
      %76 = tpu.matmul %75, %27, %cst_34 {dimension_numbers = #tpu.dot_dimension_numbers<[1], [0], [0], [1], [0, 0, 1, 1], [], []>} : vector<8x8xbf16>, vector<8x32xbf16>, vector<8x32xf32> -> vector<8x32xf32>
      %77 = arith.addf %arg11, %76 : vector<8x32xf32>
      scf.yield %56, %77 : vector<8x32xf32>, vector<8x32xf32>
    }
    %c4_i32_7 = arith.constant 4 : i32
    %c0_8 = arith.constant 0 : index
    %c0_9 = arith.constant 0 : index
    %9 = vector.load %arg6[%c0_8, %c0_9] : memref<1x32xf32, #tpu.memory_space<vmem>>, vector<1x32xf32>
    %10 = vector.broadcast %9 : vector<1x32xf32> to vector<8x32xf32>
    %11 = arith.addf %8#0, %10 : vector<8x32xf32>
    %c0_10 = arith.constant 0 : index
    %c0_11 = arith.constant 0 : index
    %12 = vector.load %arg8[%c0_10, %c0_11] : memref<16x32xf32, #tpu.memory_space<vmem>>, vector<8x32xf32>
    tpu.vector_store %arg8[%c0_10, %c0_11], %11 {strides = array<i32>} : memref<16x32xf32, #tpu.memory_space<vmem>>, vector<8x32xf32>,
    %13 = vector.broadcast %9 : vector<1x32xf32> to vector<8x32xf32>
    %14 = arith.addf %8#1, %13 : vector<8x32xf32>
    %c8 = arith.constant 8 : index
    %c0_12 = arith.constant 0 : index
    %15 = vector.load %arg8[%c8, %c0_12] : memref<16x32xf32, #tpu.memory_space<vmem>>, vector<8x32xf32>
    tpu.vector_store %arg8[%c8, %c0_12], %14 {strides = array<i32>} : memref<16x32xf32, #tpu.memory_space<vmem>>, vector<8x32xf32>,
    return
  }
  func.func @transform_0(%arg0: i32) -> (i32, i32) {
    %c0_i32 = arith.constant 0 : i32
    %c0_i32_0 = arith.constant 0 : i32
    return %arg0, %c0_i32 : i32, i32
  }
  func.func @transform_1(%arg0: i32) -> (i32, i32, i32) {
    %c0_i32 = arith.constant 0 : i32
    %c0_i32_0 = arith.constant 0 : i32
    %c0_i32_1 = arith.constant 0 : i32
    %c0_i32_2 = arith.constant 0 : i32
    return %c0_i32, %c0_i32_0, %c0_i32_1 : i32, i32, i32
  }
  func.func @transform_2(%arg0: i32) -> (i32, i32, i32) {
    %c0_i32 = arith.constant 0 : i32
    %c0_i32_0 = arith.constant 0 : i32
    %c0_i32_1 = arith.constant 0 : i32
    %c0_i32_2 = arith.constant 0 : i32
    return %c0_i32, %c0_i32_0, %c0_i32_1 : i32, i32, i32
  }
  func.func @transform_3(%arg0: i32) -> (i32, i32, i32) {
    %c0_i32 = arith.constant 0 : i32
    %c0_i32_0 = arith.constant 0 : i32
    %c0_i32_1 = arith.constant 0 : i32
    %c0_i32_2 = arith.constant 0 : i32
    return %c0_i32, %c0_i32_0, %c0_i32_1 : i32, i32, i32
  }
  func.func @transform_4(%arg0: i32) -> (i32, i32, i32) {
    %c0_i32 = arith.constant 0 : i32
    %c0_i32_0 = arith.constant 0 : i32
    %c0_i32_1 = arith.constant 0 : i32
    %c0_i32_2 = arith.constant 0 : i32
    return %c0_i32, %c0_i32_0, %c0_i32_1 : i32, i32, i32
  }
  func.func @transform_5(%arg0: i32) -> (i32, i32) {
    %c0_i32 = arith.constant 0 : i32
    %c0_i32_0 = arith.constant 0 : i32
    %c0_i32_1 = arith.constant 0 : i32
    return %c0_i32, %c0_i32_0 : i32, i32
  }
  func.func @transform_6(%arg0: i32) -> (i32, i32, i32) {
    %c0_i32 = arith.constant 0 : i32
    %c0_i32_0 = arith.constant 0 : i32
    %c0_i32_1 = arith.constant 0 : i32
    return %arg0, %c0_i32, %c0_i32_0 : i32, i32, i32
  }
  func.func @transform_7(%arg0: i32) -> (i32, i32) {
    %c0_i32 = arith.constant 0 : i32
    %c0_i32_0 = arith.constant 0 : i32
    return %arg0, %c0_i32 : i32, i32
  }
}

</mosaic_0001>

<llo_original>
// kernel: tpu_custom_call.1
$region0: #{tpu_custom_call.1}
  #allocation0 [shape = 'u32[]', space=smem, size = 0x4, offset = 0x4, fixed_abs, tag = 'smem constant byte address 0x4 - core index']
  #allocation1 [shape = 'u32[144,128]{1,0:T(1,128)}', space=vmem, size = 0x12000, scoped, tag = 'internal scratch']
  %s0 = inlined_call_operand.vmem [shape: bf16[32,32], index: 0, kind: input, shape index: {}]
  %s1 = inlined_call_operand.vmem [shape: bf16[4,32,8], index: 1, kind: input, shape index: {}]
  %s2 = inlined_call_operand.vmem [shape: bf16[4,32,8], index: 2, kind: input, shape index: {}]
  %s3 = inlined_call_operand.vmem [shape: bf16[4,32,8], index: 3, kind: input, shape index: {}]
  %s4 = inlined_call_operand.vmem [shape: bf16[4,8,32], index: 4, kind: input, shape index: {}]
  %s5 = inlined_call_operand.vmem [shape: f32[1,32], index: 5, kind: input, shape index: {}]
  %s6 = inlined_call_operand.vmem [shape: f32[4,1,8], index: 6, kind: input, shape index: {}]
  %s7 = inlined_call_operand.hbm [shape: f32[32,32], index: 7, kind: output, shape index: {}]
  %s8 = sld [smem:[#allocation0]]
  $region68: #{tpu_custom_call.1} parent=0
    _
  %s10 = ssub.s32 1, %s8
  %s11 = scalar_select 0, %s10, %s8
  $region1: #{tpu_custom_call.1} parent=0
    #allocation2 [shape = 'u8[16384]{0}', space=vmem, size = 0x4000, scoped, tag = 'output window, operand 0']
    #allocation3 [shape = 's32[2]{0}', space=sflag, size = 0x8, scoped, tag = 'scoped memory for tpu_custom_call.1']
    %12 = vsyncpa [#allocation3], 0
    %s13 = scalar_lea.sflag [#allocation3], 1
    %14 = vsyncpa %s13, 0
    loop: start=0, step=1, limit=4
    $region2: #{tpu_custom_call.1} parent=1 // loop_pre_header
      _
    $region3: #{tpu_custom_call.1} parent=1 // loop_header
      %s16 = sphi 0, %s20
      %p17 = scmp.ge.s32.totalorder %s16, 4
      %s26 = sphi 0, %s28
      %s29 = sphi 0, %s26
      %s30 = sphi 0, %s29
      %s46 = sphi 0, %s30
      %s50 = sphi 0, %s50
      %s52 = sphi 0, %s50
      %s53 = sphi 0, %s52
      %s67 = sphi 0, %s53
      %s71 = sphi 0, %s71
      %s73 = sphi 0, %s71
      %s74 = sphi 0, %s73
      %s88 = sphi 0, %s74
      %s92 = sphi 0, %s92
      %s94 = sphi 0, %s92
      %s95 = sphi 0, %s94
      %s109 = sphi 0, %s95
      %s113 = sphi 0, %s113
      %s115 = sphi 0, %s113
      %s116 = sphi 0, %s115
      %s130 = sphi 0, %s116
      %s134 = sphi 0, %s134
      %s136 = sphi 0, %s134
      %s137 = sphi 0, %s136
      %s151 = sphi 0, %s137
      %s157 = sphi 0, %s159
      %s160 = sphi 0, %s157
      %s161 = sphi 0, %s160
      %s177 = sphi 0, %s161
      %s183 = sphi 0, %s185
      %s186 = sphi 0, %s183
      %s187 = sphi 0, %s186
      %s203 = sphi 0, %s187
    $region4: #{tpu_custom_call.1} parent=1 // loop_header_branch
      %19 = sbr.rel (%p17) target = $region8
    $region5: #{tpu_custom_call.1} parent=1 // loop_body
      %s21 = ssub.s32 %s16, 1
      %s22 = ssub.s32 %s16, 2
      %s23 = sadd.s32 %s16, 1
      %s24 = ssub.s32 %s16, %s23
      %p25 = scmp.eq.s32.totalorder %s24, 0
      %s27 = sadd.s32 %s26, 1
      %s28 = scalar_select %p25, %s26, %s27
      %p31 = pneg %p25
      %p32 = scmp.eq.s32.totalorder %s16, 1
      %p33 = por %p31, %p32
      %p34 = scmp.ne.s32.totalorder %s26, %s29
      %p35 = scmp.eq.s32.totalorder %s16, 0
      %p36 = por %p34, %p35
      %p37 = scmp.ne.s32.totalorder %s26, %s29
      %p38 = scmp.eq.s32.totalorder %s21, 1
      %p39 = por %p37, %p38
      %p40 = scmp.ne.s32.totalorder %s29, %s30
      %p41 = scmp.eq.s32.totalorder %s21, 0
      %p42 = por %p40, %p41
      %p43 = scmp.ne.s32.totalorder %s29, %s30
      %p44 = scmp.eq.s32.totalorder %s22, 1
      %p45 = por %p43, %p44
      %p47 = scmp.ne.s32.totalorder %s30, %s46
      %p48 = scmp.eq.s32.totalorder %s22, 0
      %p49 = por %p47, %p48
      %s51 = sadd.s32 %s50, 1
      %p54 = scmp.eq.s32.totalorder %s16, 1
      %p55 = scmp.ne.s32.totalorder %s50, %s52
      %p56 = scmp.eq.s32.totalorder %s16, 0
      %p57 = por %p55, %p56
      %p58 = scmp.ne.s32.totalorder %s50, %s52
      %p59 = scmp.eq.s32.totalorder %s21, 1
      %p60 = por %p58, %p59
      %p61 = scmp.ne.s32.totalorder %s52, %s53
      %p62 = scmp.eq.s32.totalorder %s21, 0
      %p63 = por %p61, %p62
      %p64 = scmp.ne.s32.totalorder %s52, %s53
      %p65 = scmp.eq.s32.totalorder %s22, 1
      %p66 = por %p64, %p65
      %p68 = scmp.ne.s32.totalorder %s53, %s67
      %p69 = scmp.eq.s32.totalorder %s22, 0
      %p70 = por %p68, %p69
      %s72 = sadd.s32 %s71, 1
      %p75 = scmp.eq.s32.totalorder %s16, 1
      %p76 = scmp.ne.s32.totalorder %s71, %s73
      %p77 = scmp.eq.s32.totalorder %s16, 0
      %p78 = por %p76, %p77
      %p79 = scmp.ne.s32.totalorder %s71, %s73
      %p80 = scmp.eq.s32.totalorder %s21, 1
      %p81 = por %p79, %p80
      %p82 = scmp.ne.s32.totalorder %s73, %s74
      %p83 = scmp.eq.s32.totalorder %s21, 0
      %p84 = por %p82, %p83
      %p85 = scmp.ne.s32.totalorder %s73, %s74
      %p86 = scmp.eq.s32.totalorder %s22, 1
      %p87 = por %p85, %p86
      %p89 = scmp.ne.s32.totalorder %s74, %s88
      %p90 = scmp.eq.s32.totalorder %s22, 0
      %p91 = por %p89, %p90
      %s93 = sadd.s32 %s92, 1
      %p96 = scmp.eq.s32.totalorder %s16, 1
      %p97 = scmp.ne.s32.totalorder %s92, %s94
      %p98 = scmp.eq.s32.totalorder %s16, 0
      %p99 = por %p97, %p98
      %p100 = scmp.ne.s32.totalorder %s92, %s94
      %p101 = scmp.eq.s32.totalorder %s21, 1
      %p102 = por %p100, %p101
      %p103 = scmp.ne.s32.totalorder %s94, %s95
      %p104 = scmp.eq.s32.totalorder %s21, 0
      %p105 = por %p103, %p104
      %p106 = scmp.ne.s32.totalorder %s94, %s95
      %p107 = scmp.eq.s32.totalorder %s22, 1
      %p108 = por %p106, %p107
      %p110 = scmp.ne.s32.totalorder %s95, %s109
      %p111 = scmp.eq.s32.totalorder %s22, 0
      %p112 = por %p110, %p111
      %s114 = sadd.s32 %s113, 1
      %p117 = scmp.eq.s32.totalorder %s16, 1
      %p118 = scmp.ne.s32.totalorder %s113, %s115
      %p119 = scmp.eq.s32.totalorder %s16, 0
      %p120 = por %p118, %p119
      %p121 = scmp.ne.s32.totalorder %s113, %s115
      %p122 = scmp.eq.s32.totalorder %s21, 1
      %p123 = por %p121, %p122
      %p124 = scmp.ne.s32.totalorder %s115, %s116
      %p125 = scmp.eq.s32.totalorder %s21, 0
      %p126 = por %p124, %p125
      %p127 = scmp.ne.s32.totalorder %s115, %s116
      %p128 = scmp.eq.s32.totalorder %s22, 1
      %p129 = por %p127, %p128
      %p131 = scmp.ne.s32.totalorder %s116, %s130
      %p132 = scmp.eq.s32.totalorder %s22, 0
      %p133 = por %p131, %p132
      %s135 = sadd.s32 %s134, 1
      %p138 = scmp.eq.s32.totalorder %s16, 1
      %p139 = scmp.ne.s32.totalorder %s134, %s136
      %p140 = scmp.eq.s32.totalorder %s16, 0
      %p141 = por %p139, %p140
      %p142 = scmp.ne.s32.totalorder %s134, %s136
      %p143 = scmp.eq.s32.totalorder %s21, 1
      %p144 = por %p142, %p143
      %p145 = scmp.ne.s32.totalorder %s136, %s137
      %p146 = scmp.eq.s32.totalorder %s21, 0
      %p147 = por %p145, %p146
      %p148 = scmp.ne.s32.totalorder %s136, %s137
      %p149 = scmp.eq.s32.totalorder %s22, 1
      %p150 = por %p148, %p149
      %p152 = scmp.ne.s32.totalorder %s137, %s151
      %p153 = scmp.eq.s32.totalorder %s22, 0
      %p154 = por %p152, %p153
      %s155 = ssub.s32 %s16, %s23
      %p156 = scmp.eq.s32.totalorder %s155, 0
      %s158 = sadd.s32 %s157, 1
      %s159 = scalar_select %p156, %s157, %s158
      %p162 = pneg %p156
      %p163 = scmp.eq.s32.totalorder %s16, 1
      %p164 = por %p162, %p163
      %p165 = scmp.ne.s32.totalorder %s157, %s160
      %p166 = scmp.eq.s32.totalorder %s16, 0
      %p167 = por %p165, %p166
      %p168 = scmp.ne.s32.totalorder %s157, %s160
      %p169 = scmp.eq.s32.totalorder %s21, 1
      %p170 = por %p168, %p169
      %p171 = scmp.ne.s32.totalorder %s160, %s161
      %p172 = scmp.eq.s32.totalorder %s21, 0
      %p173 = por %p171, %p172
      %p174 = scmp.ne.s32.totalorder %s160, %s161
      %p175 = scmp.eq.s32.totalorder %s22, 1
      %p176 = por %p174, %p175
      %p178 = scmp.ne.s32.totalorder %s161, %s177
      %p179 = scmp.eq.s32.totalorder %s22, 0
      %p180 = por %p178, %p179
      %s181 = ssub.s32 %s16, %s23
      %p182 = scmp.eq.s32.totalorder %s181, 0
      %s184 = sadd.s32 %s183, 1
      %s185 = scalar_select %p182, %s183, %s184
      %p188 = pneg %p182
      %p189 = scmp.eq.s32.totalorder %s16, 1
      %p190 = por %p188, %p189
      %p191 = scmp.ne.s32.totalorder %s183, %s186
      %p192 = scmp.eq.s32.totalorder %s16, 0
      %p193 = por %p191, %p192
      %p194 = scmp.ne.s32.totalorder %s183, %s186
      %p195 = scmp.eq.s32.totalorder %s21, 1
      %p196 = por %p194, %p195
      %p197 = scmp.ne.s32.totalorder %s186, %s187
      %p198 = scmp.eq.s32.totalorder %s21, 0
      %p199 = por %p197, %p198
      %p200 = scmp.ne.s32.totalorder %s186, %s187
      %p201 = scmp.eq.s32.totalorder %s22, 1
      %p202 = por %p200, %p201
      %p204 = scmp.ne.s32.totalorder %s187, %s203
      %p205 = scmp.eq.s32.totalorder %s22, 0
      %p206 = por %p204, %p205
      %p207 = scmp.le.s32.totalorder 1, %s16
      %p208 = scmp.lt.s32.totalorder %s16, 3
      %p209 = pnand %p207, %p208
      %p210 = pneg %p209
      // Predicated region
      $region9: #{tpu_custom_call.1} parent=5 // pred_check
        _
      $region10: #{tpu_custom_call.1} parent=5 // pred_check_branch
        %212 = sbr.rel (%p209) target = $region12
      $region11: #{tpu_custom_call.1} parent=5 // pred_region
        %s213 = ssub.s32 %s16, 1
        // Predicated region
        $region13: #{tpu_custom_call.1} parent=11 // pred_check
          %p214 = pneg %p63
        $region14: #{tpu_custom_call.1} parent=11 // pred_check_branch
          %216 = sbr.rel (%p214) target = $region16
        $region15: #{tpu_custom_call.1} parent=11 // pred_region
          _
        $region16: #{tpu_custom_call.1} parent=11 // pred_fallthru
          _
        // Predicated region
        $region17: #{tpu_custom_call.1} parent=11 // pred_check
          %p217 = pneg %p84
        $region18: #{tpu_custom_call.1} parent=11 // pred_check_branch
          %219 = sbr.rel (%p217) target = $region20
        $region19: #{tpu_custom_call.1} parent=11 // pred_region
          _
        $region20: #{tpu_custom_call.1} parent=11 // pred_fallthru
          _
        // Predicated region
        $region21: #{tpu_custom_call.1} parent=11 // pred_check
          %p220 = pneg %p105
        $region22: #{tpu_custom_call.1} parent=11 // pred_check_branch
          %222 = sbr.rel (%p220) target = $region24
        $region23: #{tpu_custom_call.1} parent=11 // pred_region
          _
        $region24: #{tpu_custom_call.1} parent=11 // pred_fallthru
          _
        // Predicated region
        $region25: #{tpu_custom_call.1} parent=11 // pred_check
          %p223 = pneg %p126
        $region26: #{tpu_custom_call.1} parent=11 // pred_check_branch
          %225 = sbr.rel (%p223) target = $region28
        $region27: #{tpu_custom_call.1} parent=11 // pred_region
          _
        $region28: #{tpu_custom_call.1} parent=11 // pred_fallthru
          _
        // Predicated region
        $region29: #{tpu_custom_call.1} parent=11 // pred_check
          %p226 = pneg %p147
        $region30: #{tpu_custom_call.1} parent=11 // pred_check_branch
          %228 = sbr.rel (%p226) target = $region32
        $region31: #{tpu_custom_call.1} parent=11 // pred_region
          _
        $region32: #{tpu_custom_call.1} parent=11 // pred_fallthru
          _
      $region12: #{tpu_custom_call.1} parent=5 // pred_fallthru
        _
      %p229 = scmp.lt.s32.totalorder %s16, 2
      // Predicated region
      $region33: #{tpu_custom_call.1} parent=5 // pred_check
        %p230 = pneg %p229
      $region34: #{tpu_custom_call.1} parent=5 // pred_check_branch
        %232 = sbr.rel (%p230) target = $region36
      $region35: #{tpu_custom_call.1} parent=5 // pred_region
        // Predicated region
        $region37: #{tpu_custom_call.1} parent=35 // pred_check
          %p233 = pneg %p36
        $region38: #{tpu_custom_call.1} parent=35 // pred_check_branch
          %235 = sbr.rel (%p233) target = $region40
        $region39: #{tpu_custom_call.1} parent=35 // pred_region
          %s236 = smul.u32 2, %s16
          %p237 = scmp.lt.s32.totalorder %s236, 3
          %s238 = scalar_select %p237, %s236, 3
          %s239 = smul.addr %s238, 4
          %s240 = scalar_lea.vmem %s0, %s239
          %s241 = smul.u32 2, %s16
        $region40: #{tpu_custom_call.1} parent=35 // pred_fallthru
          _
        // Predicated region
        $region41: #{tpu_custom_call.1} parent=35 // pred_check
          %p242 = pneg %p167
        $region42: #{tpu_custom_call.1} parent=35 // pred_check_branch
          %244 = sbr.rel (%p242) target = $region44
        $region43: #{tpu_custom_call.1} parent=35 // pred_region
          %s245 = smul.u32 2, %s16
          %p246 = scmp.lt.s32.totalorder %s245, 3
          %s247 = scalar_select %p246, %s245, 3
          %s248 = scalar_lea.vmem %s6, %s247
          %s249 = smul.u32 2, %s16
        $region44: #{tpu_custom_call.1} parent=35 // pred_fallthru
          _
      $region36: #{tpu_custom_call.1} parent=5 // pred_fallthru
        _
      %p250 = scmp.le.s32.totalorder 1, %s16
      %p251 = scmp.lt.s32.totalorder %s16, 3
      %p252 = pnand %p250, %p251
      %p253 = pneg %p252
      // Predicated region
      $region45: #{tpu_custom_call.1} parent=5 // pred_check
        _
      $region46: #{tpu_custom_call.1} parent=5 // pred_check_branch
        %255 = sbr.rel (%p252) target = $region48
      $region47: #{tpu_custom_call.1} parent=5 // pred_region
        %s256 = ssub.s32 %s16, 1
        %s257 = smul.u32 2, %s21
        %p258 = scmp.lt.s32.totalorder %s257, 3
        %s259 = scalar_select %p258, %s257, 3
        %s260 = smul.addr %s259, 4
        %s261 = scalar_lea.vmem %s0, %s260
        %p262 = pneg %p42
        %p263 = pneg %p39
        %p264 = pneg %p63
        %p265 = pneg %p60
        %p266 = pneg %p84
        %p267 = pneg %p81
        %p268 = pneg %p105
        %p269 = pneg %p102
        %p270 = pneg %p126
        %p271 = pneg %p123
        %p272 = pneg %p147
        %p273 = pneg %p144
        %s274 = smul.u32 2, %s21
        %p275 = scmp.lt.s32.totalorder %s274, 3
        %s276 = scalar_select %p275, %s274, 3
        %s277 = scalar_lea.vmem %s6, %s276
        %p278 = pneg %p173
        %p279 = pneg %p170
        %p280 = pneg %p199
        %p281 = pneg %p196
        %s282 = sand.u32 %s186, 1
        %s283 = scalar_lea.sflag [#allocation3], %s282
        %s284 = sand.u32 %s186, 1
        %s285 = smul.addr %s284, 16
        %s286 = scalar_lea.vmem [#allocation2], %s285
        %s287 = smul.u32 2, %s21
        %p288 = scmp.lt.s32.totalorder %s287, 3
        %s289 = scalar_select %p288, %s287, 3
        %s290 = smul.addr %s289, 4
        %s291 = scalar_lea.vmem %s0, %s290
        %s292 = smul.u32 2, %s21
        %s293 = smul.u32 2, %s21
        %p294 = scmp.lt.s32.totalorder %s293, 3
        %s295 = scalar_select %p294, %s293, 3
        %s296 = scalar_lea.vmem %s6, %s295
        %s297 = smul.u32 2, %s21
        %s298 = smul.u32 2, %s21
        %v300 = vld [vmem:[%s291] sm:$0xf]
        %v301 = vld [vmem:[%s291 + $0x4] sm:$0xf]
        %v302 = vld [vmem:[%s296] sm:$0x1]
        %s303 = scalar_lea.vmem %s296, 1
        %v304 = vld [vmem:[%s303] sm:$0x1]
        loop: start=0, step=1, limit=4
        $region49: #{tpu_custom_call.1} parent=47 // loop_pre_header
          _
        $region50: #{tpu_custom_call.1} parent=47 // loop_header
          %s306 = sphi 0, %s310
          %p307 = scmp.ge.s32.totalorder %s306, 4
          %v311 = vphi 0.0, %v667
          %v312 = vphi 0.0, %v828
        $region51: #{tpu_custom_call.1} parent=47 // loop_header_branch
          %309 = sbr.rel (%p307) target = $region55
        $region52: #{tpu_custom_call.1} parent=47 // loop_body
          %s313 = smul.u32 %s306, 4
          %s314 = smul.addr %s313, 4
          %s315 = scalar_lea.vmem %s1, %s314
          %v316 = vld [vmem:[%s315] sm:$0xf]
          %v317 = vld [vmem:[%s315 + $0x4] sm:$0xf]
          %v318 = vld [vmem:[%s315 + $0x8] sm:$0xf]
          %v319 = vld [vmem:[%s315 + $0xc] sm:$0xf]
          %s320 = smul.addr %s313, 4
          %s321 = scalar_lea.vmem %s2, %s320
          %v322 = vld [vmem:[%s321] sm:$0xf]
          %v323 = vld [vmem:[%s321 + $0x4] sm:$0xf]
          %v324 = vld [vmem:[%s321 + $0x8] sm:$0xf]
          %v325 = vld [vmem:[%s321 + $0xc] sm:$0xf]
          %s326 = smul.addr %s313, 4
          %s327 = scalar_lea.vmem %s3, %s326
          %v328 = vld [vmem:[%s327] sm:$0xf]
          %v329 = vld [vmem:[%s327 + $0x4] sm:$0xf]
          %v330 = vld [vmem:[%s327 + $0x8] sm:$0xf]
          %v331 = vld [vmem:[%s327 + $0xc] sm:$0xf]
          %s332 = smul.addr %s306, 4
          %s333 = scalar_lea.vmem %s4, %s332
          %v334 = vld [vmem:[%s333] sm:$0xf]
          %v337 = vunpack.c.l.b16 %v300
          %v338 = vunpack.c.l.b16 %v301
          %v339 = vpack.c.b16 %v338, %v337
          %v344 = vunpack.c.l.b16 %v316
          %v345 = vunpack.c.l.b16 %v317
          %v346 = vunpack.c.l.b16 %v318
          %v347 = vunpack.c.l.b16 %v319
          %v348 = vpack.c.b16 %v345, %v344
          %v349 = vpack.c.b16 %v347, %v346
          %vm352 = vcmask 261120
          %v354 = vsel %vm352, %v339, 0
          %356 = vmatprep.subr.bf16.mxu0 0
          %357 = vmatpush1.bf16.msra.mxu0 0
          %358 = vmatprep.subr.bf16.mxu0 0
          %359 = vmatpush1.bf16.msra.mxu0 0
          %360 = vmatprep.subr.bf16.mxu0 0
          %361 = vmatpush1.bf16.msra.mxu0 0
          %362 = vmatprep.subr.bf16.mxu0 0
          %363 = vmatpush1.bf16.msra.mxu0 0
          %364 = vmatprep.subr.bf16.mxu0 0
          %365 = vmatpush1.bf16.msra.mxu0 0
          %366 = vmatprep.subr.bf16.mxu0 0
          %367 = vmatpush1.bf16.msra.mxu0 0
          %368 = vmatprep.subr.bf16.mxu0 0
          %369 = vmatpush1.bf16.msra.mxu0 %v349
          %370 = vmatprep.subr.bf16.mxu0 0
          %371 = vmatpush1.bf16.msra.mxu0 %v348
          %372 = vmatprep.subr.bf16.mxu0 0
          %373 = vmatpush2.bf16.msra.mxu0 0
          %374 = vmatprep.subr.bf16.mxu0 0
          %375 = vmatpush2.bf16.msra.mxu0 0
          %376 = vmatprep.subr.bf16.mxu0 0
          %377 = vmatpush2.bf16.msra.mxu0 0
          %378 = vmatprep.subr.bf16.mxu0 0
          %379 = vmatpush2.bf16.msra.mxu0 0
          %380 = vmatprep.subr.bf16.mxu0 0
          %381 = vmatpush2.bf16.msra.mxu0 0
          %382 = vmatprep.subr.bf16.mxu0 0
          %383 = vmatpush2.bf16.msra.mxu0 0
          %384 = vmatprep.subr.bf16.mxu0 0
          %385 = vmatpush2.bf16.msra.mxu0 0
          %386 = vmatprep.subr.bf16.mxu0 0
          %387 = vmatpush2.bf16.msra.mxu0 0
          %388 = vmatprep.mubr.bf16.mxu0 0
          %389 = vmatmul.mubr.bf16.gmra.mxu0 %v354
          %v390 = vpop.f32.mrf.mxu0
          %v391 = vadd.f32 0.0, %v390
          %v392 = vpop.f32.mrf.mxu0
          %v393 = vpop.f32.mrf.mxu0
          %v394 = vadd.f32 0.0, %v393
          %v395 = vpop.f32.mrf.mxu0
          %396 = vdwg.mxu0
          %v401 = vunpack.c.l.b16 %v322
          %v402 = vunpack.c.l.b16 %v323
          %v403 = vunpack.c.l.b16 %v324
          %v404 = vunpack.c.l.b16 %v325
          %v405 = vpack.c.b16 %v402, %v401
          %v406 = vpack.c.b16 %v404, %v403
          %409 = vmatprep.subr.bf16.mxu0 0
          %410 = vmatpush1.bf16.msra.mxu0 0
          %411 = vmatprep.subr.bf16.mxu0 0
          %412 = vmatpush1.bf16.msra.mxu0 0
          %413 = vmatprep.subr.bf16.mxu0 0
          %414 = vmatpush1.bf16.msra.mxu0 0
          %415 = vmatprep.subr.bf16.mxu0 0
          %416 = vmatpush1.bf16.msra.mxu0 0
          %417 = vmatprep.subr.bf16.mxu0 0
          %418 = vmatpush1.bf16.msra.mxu0 0
          %419 = vmatprep.subr.bf16.mxu0 0
          %420 = vmatpush1.bf16.msra.mxu0 0
          %421 = vmatprep.subr.bf16.mxu0 0
          %422 = vmatpush1.bf16.msra.mxu0 %v406
          %423 = vmatprep.subr.bf16.mxu0 0
          %424 = vmatpush1.bf16.msra.mxu0 %v405
          %425 = vmatprep.subr.bf16.mxu0 0
          %426 = vmatpush2.bf16.msra.mxu0 0
          %427 = vmatprep.subr.bf16.mxu0 0
          %428 = vmatpush2.bf16.msra.mxu0 0
          %429 = vmatprep.subr.bf16.mxu0 0
          %430 = vmatpush2.bf16.msra.mxu0 0
          %431 = vmatprep.subr.bf16.mxu0 0
          %432 = vmatpush2.bf16.msra.mxu0 0
          %433 = vmatprep.subr.bf16.mxu0 0
          %434 = vmatpush2.bf16.msra.mxu0 0
          %435 = vmatprep.subr.bf16.mxu0 0
          %436 = vmatpush2.bf16.msra.mxu0 0
          %437 = vmatprep.subr.bf16.mxu0 0
          %438 = vmatpush2.bf16.msra.mxu0 0
          %439 = vmatprep.subr.bf16.mxu0 0
          %440 = vmatpush2.bf16.msra.mxu0 0
          %441 = vmatprep.mubr.bf16.mxu0 0
          %442 = vmatmul.mubr.bf16.gmra.mxu0 %v354
          %v443 = vpop.f32.mrf.mxu0
          %v444 = vadd.f32 0.0, %v443
          %v445 = vpop.f32.mrf.mxu0
          %v446 = vpop.f32.mrf.mxu0
          %v447 = vadd.f32 0.0, %v446
          %v448 = vpop.f32.mrf.mxu0
          %449 = vdwg.mxu0
          %v454 = vunpack.c.l.b16 %v328
          %v455 = vunpack.c.l.b16 %v329
          %v456 = vunpack.c.l.b16 %v330
          %v457 = vunpack.c.l.b16 %v331
          %v458 = vpack.c.b16 %v455, %v454
          %v459 = vpack.c.b16 %v457, %v456
          %462 = vmatprep.subr.bf16.mxu0 0
          %463 = vmatpush1.bf16.msra.mxu0 0
          %464 = vmatprep.subr.bf16.mxu0 0
          %465 = vmatpush1.bf16.msra.mxu0 0
          %466 = vmatprep.subr.bf16.mxu0 0
          %467 = vmatpush1.bf16.msra.mxu0 0
          %468 = vmatprep.subr.bf16.mxu0 0
          %469 = vmatpush1.bf16.msra.mxu0 0
          %470 = vmatprep.subr.bf16.mxu0 0
          %471 = vmatpush1.bf16.msra.mxu0 0
          %472 = vmatprep.subr.bf16.mxu0 0
          %473 = vmatpush1.bf16.msra.mxu0 0
          %474 = vmatprep.subr.bf16.mxu0 0
          %475 = vmatpush1.bf16.msra.mxu0 %v459
          %476 = vmatprep.subr.bf16.mxu0 0
          %477 = vmatpush1.bf16.msra.mxu0 %v458
          %478 = vmatprep.subr.bf16.mxu0 0
          %479 = vmatpush2.bf16.msra.mxu0 0
          %480 = vmatprep.subr.bf16.mxu0 0
          %481 = vmatpush2.bf16.msra.mxu0 0
          %482 = vmatprep.subr.bf16.mxu0 0
          %483 = vmatpush2.bf16.msra.mxu0 0
          %484 = vmatprep.subr.bf16.mxu0 0
          %485 = vmatpush2.bf16.msra.mxu0 0
          %486 = vmatprep.subr.bf16.mxu0 0
          %487 = vmatpush2.bf16.msra.mxu0 0
          %488 = vmatprep.subr.bf16.mxu0 0
          %489 = vmatpush2.bf16.msra.mxu0 0
          %490 = vmatprep.subr.bf16.mxu0 0
          %491 = vmatpush2.bf16.msra.mxu0 0
          %492 = vmatprep.subr.bf16.mxu0 0
          %493 = vmatpush2.bf16.msra.mxu0 0
          %494 = vmatprep.mubr.bf16.mxu0 0
          %495 = vmatmul.mubr.bf16.gmra.mxu0 %v354
          %v496 = vpop.f32.mrf.mxu0
          %v497 = vadd.f32 0.0, %v496
          %v498 = vpop.f32.mrf.mxu0
          %v499 = vpop.f32.mrf.mxu0
          %v500 = vadd.f32 0.0, %v499
          %v501 = vpop.f32.mrf.mxu0
          %502 = vdwg.mxu0
          %v503 = vmul.f32 %v391, 0.35355338
          %v504 = vmul.f32 %v394, 0.35355338
          %v505 = vpack.c.bf16 %v504, %v503
          %v506 = vpack.c.bf16 %v447, %v444
          %v507 = vpack.c.bf16 %v500, %v497
          %v509 = vlaneseq
          %v510 = vshrl.u32 %v509, 7
          %v511 = vsub.s32 0, %v510
          %v512 = vrot.slane %v302, %v511
          %vm514 = vcmask 64512
          %v516 = vsel %vm514, %v505, 0
          %v519 = vsel %vm514, %v506, 0
          %521 = vmatprep.subr.bf16.mxu0 0
          %522 = vmatpush1.bf16.xpose.msra.mxu0 0
          %523 = vmatprep.subr.bf16.mxu0 0
          %524 = vmatpush1.bf16.xpose.msra.mxu0 0
          %525 = vmatprep.subr.bf16.mxu0 0
          %526 = vmatpush1.bf16.xpose.msra.mxu0 0
          %527 = vmatprep.subr.bf16.mxu0 0
          %528 = vmatpush1.bf16.xpose.msra.mxu0 0
          %529 = vmatprep.subr.bf16.mxu0 0
          %530 = vmatpush1.bf16.xpose.msra.mxu0 0
          %531 = vmatprep.subr.bf16.mxu0 0
          %532 = vmatpush1.bf16.xpose.msra.mxu0 0
          %533 = vmatprep.subr.bf16.mxu0 0
          %534 = vmatpush1.bf16.xpose.msra.mxu0 0
          %535 = vmatprep.subr.bf16.mxu0 0
          %536 = vmatpush1.bf16.xpose.msra.mxu0 %v519
          %537 = vmatprep.subr.bf16.mxu0 0
          %538 = vmatpush2.bf16.xpose.msra.mxu0 0
          %539 = vmatprep.subr.bf16.mxu0 0
          %540 = vmatpush2.bf16.xpose.msra.mxu0 0
          %541 = vmatprep.subr.bf16.mxu0 0
          %542 = vmatpush2.bf16.xpose.msra.mxu0 0
          %543 = vmatprep.subr.bf16.mxu0 0
          %544 = vmatpush2.bf16.xpose.msra.mxu0 0
          %545 = vmatprep.subr.bf16.mxu0 0
          %546 = vmatpush2.bf16.xpose.msra.mxu0 0
          %547 = vmatprep.subr.bf16.mxu0 0
          %548 = vmatpush2.bf16.xpose.msra.mxu0 0
          %549 = vmatprep.subr.bf16.mxu0 0
          %550 = vmatpush2.bf16.xpose.msra.mxu0 0
          %551 = vmatprep.subr.bf16.mxu0 0
          %552 = vmatpush2.bf16.xpose.msra.mxu0 0
          %553 = vmatprep.mubr.bf16.mxu0 0
          %554 = vmatmul.mubr.bf16.gmra.mxu0 %v516
          %v555 = vpop.f32.mrf.mxu0
          %v556 = vadd.f32 %v512, %v555
          %v557 = vpop.f32.mrf.mxu0
          %v558 = vpop.f32.mrf.mxu0
          %v559 = vpop.f32.mrf.mxu0
          %560 = vdwg.mxu0
          %v561 = vsel %vm514, %v556, -inf
          %562 = vmax.xlane.f32.xlu0 %v561
          %v563 = vpop.xlane.xlu0 %562
          %v564 = vsub.f32 %v556, %v563
          %v565 = vmul.f32 %v564, 1.442695
          %v566 = vpow.pop %v565
          %v567 = vsel %vm514, %v566, 0.0
          %568 = vadd.xlane.f32.xlu0 %v567
          %v569 = vpop.xlane.xlu0 %568
          %v570 = vrcp.pop %v569
          %v571 = vmul.f32 %v566, %v570
          %v572 = vpack.c.bf16 %v571, %v571
          %v574 = vsel %vm514, %v572, 0
          %vm576 = vcmask 1043456
          %v578 = vsel %vm576, %v507, 0
          %580 = vmatprep.subr.bf16.mxu0 0
          %581 = vmatpush1.bf16.msra.mxu0 0
          %582 = vmatprep.subr.bf16.mxu0 0
          %583 = vmatpush1.bf16.msra.mxu0 0
          %584 = vmatprep.subr.bf16.mxu0 0
          %585 = vmatpush1.bf16.msra.mxu0 0
          %586 = vmatprep.subr.bf16.mxu0 0
          %587 = vmatpush1.bf16.msra.mxu0 0
          %588 = vmatprep.subr.bf16.mxu0 0
          %589 = vmatpush1.bf16.msra.mxu0 0
          %590 = vmatprep.subr.bf16.mxu0 0
          %591 = vmatpush1.bf16.msra.mxu0 0
          %592 = vmatprep.subr.bf16.mxu0 0
          %593 = vmatpush1.bf16.msra.mxu0 0
          %594 = vmatprep.subr.bf16.mxu0 0
          %595 = vmatpush1.bf16.msra.mxu0 %v578
          %596 = vmatprep.subr.bf16.mxu0 0
          %597 = vmatpush2.bf16.msra.mxu0 0
          %598 = vmatprep.subr.bf16.mxu0 0
          %599 = vmatpush2.bf16.msra.mxu0 0
          %600 = vmatprep.subr.bf16.mxu0 0
          %601 = vmatpush2.bf16.msra.mxu0 0
          %602 = vmatprep.subr.bf16.mxu0 0
          %603 = vmatpush2.bf16.msra.mxu0 0
          %604 = vmatprep.subr.bf16.mxu0 0
          %605 = vmatpush2.bf16.msra.mxu0 0
          %606 = vmatprep.subr.bf16.mxu0 0
          %607 = vmatpush2.bf16.msra.mxu0 0
          %608 = vmatprep.subr.bf16.mxu0 0
          %609 = vmatpush2.bf16.msra.mxu0 0
          %610 = vmatprep.subr.bf16.mxu0 0
          %611 = vmatpush2.bf16.msra.mxu0 0
          %612 = vmatprep.mubr.bf16.mxu0 0
          %613 = vmatmul.mubr.bf16.gmra.mxu0 %v574
          %v614 = vpop.f32.mrf.mxu0
          %v615 = vadd.f32 0.0, %v614
          %v616 = vpop.f32.mrf.mxu0
          %v617 = vpop.f32.mrf.mxu0
          %v618 = vpop.f32.mrf.mxu0
          %619 = vdwg.mxu0
          %v620 = vpack.c.bf16 %v615, %v615
          %v622 = vsel %vm514, %v620, 0
          %v625 = vsel %vm576, %v334, 0
          %627 = vmatprep.subr.bf16.mxu0 0
          %628 = vmatpush1.bf16.msra.mxu0 0
          %629 = vmatprep.subr.bf16.mxu0 0
          %630 = vmatpush1.bf16.msra.mxu0 0
          %631 = vmatprep.subr.bf16.mxu0 0
          %632 = vmatpush1.bf16.msra.mxu0 0
          %633 = vmatprep.subr.bf16.mxu0 0
          %634 = vmatpush1.bf16.msra.mxu0 0
          %635 = vmatprep.subr.bf16.mxu0 0
          %636 = vmatpush1.bf16.msra.mxu0 0
          %637 = vmatprep.subr.bf16.mxu0 0
          %638 = vmatpush1.bf16.msra.mxu0 0
          %639 = vmatprep.subr.bf16.mxu0 0
          %640 = vmatpush1.bf16.msra.mxu0 0
          %641 = vmatprep.subr.bf16.mxu0 0
          %642 = vmatpush1.bf16.msra.mxu0 %v625
          %643 = vmatprep.subr.bf16.mxu0 0
          %644 = vmatpush2.bf16.msra.mxu0 0
          %645 = vmatprep.subr.bf16.mxu0 0
          %646 = vmatpush2.bf16.msra.mxu0 0
          %647 = vmatprep.subr.bf16.mxu0 0
          %648 = vmatpush2.bf16.msra.mxu0 0
          %649 = vmatprep.subr.bf16.mxu0 0
          %650 = vmatpush2.bf16.msra.mxu0 0
          %651 = vmatprep.subr.bf16.mxu0 0
          %652 = vmatpush2.bf16.msra.mxu0 0
          %653 = vmatprep.subr.bf16.mxu0 0
          %654 = vmatpush2.bf16.msra.mxu0 0
          %655 = vmatprep.subr.bf16.mxu0 0
          %656 = vmatpush2.bf16.msra.mxu0 0
          %657 = vmatprep.subr.bf16.mxu0 0
          %658 = vmatpush2.bf16.msra.mxu0 0
          %659 = vmatprep.mubr.bf16.mxu0 0
          %660 = vmatmul.mubr.bf16.gmra.mxu0 %v622
          %v661 = vpop.f32.mrf.mxu0
          %v662 = vadd.f32 0.0, %v661
          %v663 = vpop.f32.mrf.mxu0
          %v664 = vpop.f32.mrf.mxu0
          %v665 = vpop.f32.mrf.mxu0
          %666 = vdwg.mxu0
          %v667 = vadd.f32 %v311, %v662
          %v669 = vlaneseq
          %v670 = vshrl.u32 %v669, 7
          %v671 = vsub.s32 0, %v670
          %v672 = vrot.slane %v304, %v671
          %v675 = vrot.slane %v505, 4
          %v677 = vrot.slane %v506, 4
          %v679 = vsel %vm514, %v675, 0
          %v682 = vsel %vm514, %v677, 0
          %684 = vmatprep.subr.bf16.mxu0 0
          %685 = vmatpush1.bf16.xpose.msra.mxu0 0
          %686 = vmatprep.subr.bf16.mxu0 0
          %687 = vmatpush1.bf16.xpose.msra.mxu0 0
          %688 = vmatprep.subr.bf16.mxu0 0
          %689 = vmatpush1.bf16.xpose.msra.mxu0 0
          %690 = vmatprep.subr.bf16.mxu0 0
          %691 = vmatpush1.bf16.xpose.msra.mxu0 0
          %692 = vmatprep.subr.bf16.mxu0 0
          %693 = vmatpush1.bf16.xpose.msra.mxu0 0
          %694 = vmatprep.subr.bf16.mxu0 0
          %695 = vmatpush1.bf16.xpose.msra.mxu0 0
          %696 = vmatprep.subr.bf16.mxu0 0
          %697 = vmatpush1.bf16.xpose.msra.mxu0 0
          %698 = vmatprep.subr.bf16.mxu0 0
          %699 = vmatpush1.bf16.xpose.msra.mxu0 %v682
          %700 = vmatprep.subr.bf16.mxu0 0
          %701 = vmatpush2.bf16.xpose.msra.mxu0 0
          %702 = vmatprep.subr.bf16.mxu0 0
          %703 = vmatpush2.bf16.xpose.msra.mxu0 0
          %704 = vmatprep.subr.bf16.mxu0 0
          %705 = vmatpush2.bf16.xpose.msra.mxu0 0
          %706 = vmatprep.subr.bf16.mxu0 0
          %707 = vmatpush2.bf16.xpose.msra.mxu0 0
          %708 = vmatprep.subr.bf16.mxu0 0
          %709 = vmatpush2.bf16.xpose.msra.mxu0 0
          %710 = vmatprep.subr.bf16.mxu0 0
          %711 = vmatpush2.bf16.xpose.msra.mxu0 0
          %712 = vmatprep.subr.bf16.mxu0 0
          %713 = vmatpush2.bf16.xpose.msra.mxu0 0
          %714 = vmatprep.subr.bf16.mxu0 0
          %715 = vmatpush2.bf16.xpose.msra.mxu0 0
          %716 = vmatprep.mubr.bf16.mxu0 0
          %717 = vmatmul.mubr.bf16.gmra.mxu0 %v679
          %v718 = vpop.f32.mrf.mxu0
          %v719 = vadd.f32 %v672, %v718
          %v720 = vpop.f32.mrf.mxu0
          %v721 = vpop.f32.mrf.mxu0
          %v722 = vpop.f32.mrf.mxu0
          %723 = vdwg.mxu0
          %v724 = vsel %vm514, %v719, -inf
          %725 = vmax.xlane.f32.xlu0 %v724
          %v726 = vpop.xlane.xlu0 %725
          %v727 = vsub.f32 %v719, %v726
          %v728 = vmul.f32 %v727, 1.442695
          %v729 = vpow.pop %v728
          %v730 = vsel %vm514, %v729, 0.0
          %731 = vadd.xlane.f32.xlu0 %v730
          %v732 = vpop.xlane.xlu0 %731
          %v733 = vrcp.pop %v732
          %v734 = vmul.f32 %v729, %v733
          %v735 = vpack.c.bf16 %v734, %v734
          %v737 = vrot.slane %v507, 4
          %v739 = vsel %vm514, %v735, 0
          %v742 = vsel %vm576, %v737, 0
          %744 = vmatprep.subr.bf16.mxu0 0
          %745 = vmatpush1.bf16.msra.mxu0 0
          %746 = vmatprep.subr.bf16.mxu0 0
          %747 = vmatpush1.bf16.msra.mxu0 0
          %748 = vmatprep.subr.bf16.mxu0 0
          %749 = vmatpush1.bf16.msra.mxu0 0
          %750 = vmatprep.subr.bf16.mxu0 0
          %751 = vmatpush1.bf16.msra.mxu0 0
          %752 = vmatprep.subr.bf16.mxu0 0
          %753 = vmatpush1.bf16.msra.mxu0 0
          %754 = vmatprep.subr.bf16.mxu0 0
          %755 = vmatpush1.bf16.msra.mxu0 0
          %756 = vmatprep.subr.bf16.mxu0 0
          %757 = vmatpush1.bf16.msra.mxu0 0
          %758 = vmatprep.subr.bf16.mxu0 0
          %759 = vmatpush1.bf16.msra.mxu0 %v742
          %760 = vmatprep.subr.bf16.mxu0 0
          %761 = vmatpush2.bf16.msra.mxu0 0
          %762 = vmatprep.subr.bf16.mxu0 0
          %763 = vmatpush2.bf16.msra.mxu0 0
          %764 = vmatprep.subr.bf16.mxu0 0
          %765 = vmatpush2.bf16.msra.mxu0 0
          %766 = vmatprep.subr.bf16.mxu0 0
          %767 = vmatpush2.bf16.msra.mxu0 0
          %768 = vmatprep.subr.bf16.mxu0 0
          %769 = vmatpush2.bf16.msra.mxu0 0
          %770 = vmatprep.subr.bf16.mxu0 0
          %771 = vmatpush2.bf16.msra.mxu0 0
          %772 = vmatprep.subr.bf16.mxu0 0
          %773 = vmatpush2.bf16.msra.mxu0 0
          %774 = vmatprep.subr.bf16.mxu0 0
          %775 = vmatpush2.bf16.msra.mxu0 0
          %776 = vmatprep.mubr.bf16.mxu0 0
          %777 = vmatmul.mubr.bf16.gmra.mxu0 %v739
          %v778 = vpop.f32.mrf.mxu0
          %v779 = vadd.f32 0.0, %v778
          %v780 = vpop.f32.mrf.mxu0
          %v781 = vpop.f32.mrf.mxu0
          %v782 = vpop.f32.mrf.mxu0
          %783 = vdwg.mxu0
          %v784 = vpack.c.bf16 %v779, %v779
          %v786 = vsel %vm514, %v784, 0
          %788 = vmatprep.subr.bf16.mxu0 0
          %789 = vmatpush1.bf16.msra.mxu0 0
          %790 = vmatprep.subr.bf16.mxu0 0
          %791 = vmatpush1.bf16.msra.mxu0 0
          %792 = vmatprep.subr.bf16.mxu0 0
          %793 = vmatpush1.bf16.msra.mxu0 0
          %794 = vmatprep.subr.bf16.mxu0 0
          %795 = vmatpush1.bf16.msra.mxu0 0
          %796 = vmatprep.subr.bf16.mxu0 0
          %797 = vmatpush1.bf16.msra.mxu0 0
          %798 = vmatprep.subr.bf16.mxu0 0
          %799 = vmatpush1.bf16.msra.mxu0 0
          %800 = vmatprep.subr.bf16.mxu0 0
          %801 = vmatpush1.bf16.msra.mxu0 0
          %802 = vmatprep.subr.bf16.mxu0 0
          %803 = vmatpush1.bf16.msra.mxu0 %v625
          %804 = vmatprep.subr.bf16.mxu0 0
          %805 = vmatpush2.bf16.msra.mxu0 0
          %806 = vmatprep.subr.bf16.mxu0 0
          %807 = vmatpush2.bf16.msra.mxu0 0
          %808 = vmatprep.subr.bf16.mxu0 0
          %809 = vmatpush2.bf16.msra.mxu0 0
          %810 = vmatprep.subr.bf16.mxu0 0
          %811 = vmatpush2.bf16.msra.mxu0 0
          %812 = vmatprep.subr.bf16.mxu0 0
          %813 = vmatpush2.bf16.msra.mxu0 0
          %814 = vmatprep.subr.bf16.mxu0 0
          %815 = vmatpush2.bf16.msra.mxu0 0
          %816 = vmatprep.subr.bf16.mxu0 0
          %817 = vmatpush2.bf16.msra.mxu0 0
          %818 = vmatprep.subr.bf16.mxu0 0
          %819 = vmatpush2.bf16.msra.mxu0 0
          %820 = vmatprep.mubr.bf16.mxu0 0
          %821 = vmatmul.mubr.bf16.gmra.mxu0 %v786
          %v822 = vpop.f32.mrf.mxu0
          %v823 = vadd.f32 0.0, %v822
          %v824 = vpop.f32.mrf.mxu0
          %v825 = vpop.f32.mrf.mxu0
          %v826 = vpop.f32.mrf.mxu0
          %827 = vdwg.mxu0
          %v828 = vadd.f32 %v312, %v823
        $region53: #{tpu_custom_call.1} parent=47 // loop_footer
          %s310 = sadd.s32 1, %s306
        $region54: #{tpu_custom_call.1} parent=47 // loop_footer_branch
          %305 = sbr.rel target = $region50
        $region55: #{tpu_custom_call.1} parent=47 // loop_exit
          _
        %v829 = vld [vmem:[%s5] sm:$0x1]
        %v831 = vlaneseq
        %v832 = vshrl.u32 %v831, 7
        %v833 = vsub.s32 0, %v832
        %v834 = vrot.slane %v829, %v833
        %v836 = vadd.f32 %v311, %v834
        %vm837 = vcmask 261120
        %838 = vst.msk [vmem:[%s286] sm:$0xff] %vm837, %v836
        %v839 = vadd.f32 %v312, %v834
        %840 = vst.msk [vmem:[%s286 + $0x8] sm:$0xff] %vm837, %v839
        %s841 = sand.u32 %s186, 1
        %s842 = scalar_lea.sflag [#allocation3], %s841
        %s843 = sand.u32 %s186, 1
        %s844 = smul.addr %s843, 16
        %s845 = scalar_lea.vmem [#allocation2], %s844
        // Predicated region
        $region56: #{tpu_custom_call.1} parent=47 // pred_check
          %p846 = pneg %p196
        $region57: #{tpu_custom_call.1} parent=47 // pred_check_branch
          %848 = sbr.rel (%p846) target = $region59
        $region58: #{tpu_custom_call.1} parent=47 // pred_region
          %s849 = smul.u32 2, %s21
          %s851 = ssub.s32 256, 256
          %852 = vsyncadd %s842, %s851
          %s853 = smul.addr %s849, 128
          %s854 = scalar_lea.hbm %s7, %s853
          %s855 = sshll.u32 %s845, 4
          %s856 = int_to_ptr.vmem [resolvable:$true] %s855
          %861 = dma.vmem_to_hbm [thread:$0]  %s856, 256, %s854, %s842, 128, 128, 8
        $region59: #{tpu_custom_call.1} parent=47 // pred_fallthru
          _
      $region48: #{tpu_custom_call.1} parent=5 // pred_fallthru
        _
      %p862 = scmp.le.s32.totalorder 2, %s16
      // Predicated region
      $region60: #{tpu_custom_call.1} parent=5 // pred_check
        %p863 = pneg %p862
      $region61: #{tpu_custom_call.1} parent=5 // pred_check_branch
        %865 = sbr.rel (%p863) target = $region63
      $region62: #{tpu_custom_call.1} parent=5 // pred_region
        %s866 = ssub.s32 %s16, 2
        // Predicated region
        $region64: #{tpu_custom_call.1} parent=62 // pred_check
          %p867 = pneg %p202
        $region65: #{tpu_custom_call.1} parent=62 // pred_check_branch
          %869 = sbr.rel (%p867) target = $region67
        $region66: #{tpu_custom_call.1} parent=62 // pred_region
          %s870 = sand.u32 %s187, 1
          %s871 = scalar_lea.sflag [#allocation3], %s870
          %s872 = sand.u32 %s187, 1
          %s873 = smul.addr %s872, 16
          %s874 = scalar_lea.vmem [#allocation2], %s873
          %875 = dma.done %s871, 256
        $region67: #{tpu_custom_call.1} parent=62 // pred_fallthru
          _
      $region63: #{tpu_custom_call.1} parent=5 // pred_fallthru
        _
    $region6: #{tpu_custom_call.1} parent=1 // loop_footer
      %s20 = sadd.s32 1, %s16
    $region7: #{tpu_custom_call.1} parent=1 // loop_footer_branch
      %15 = sbr.rel target = $region3
    $region8: #{tpu_custom_call.1} parent=1 // loop_exit
      _
    %876 = vsyncpa [#allocation3], 1
    %s877 = scalar_lea.sflag [#allocation3], 1
    %878 = vsyncpa %s877, 1

</llo_original>
